<compile_context>
chip_gen: v7x
topology: tpu7x:2x2x1
jax: 0.10.0
libtpu: 0.0.40
codegen_flags: <defaults>
</compile_context>

<pallas_src>
import jax
import jax.numpy as jnp
from jax.experimental import pallas as pl
from jax.experimental.pallas import tpu as pltpu


def _round_up(x, m):
    return ((x + m - 1) // m) * m


# ---------------------------------------------------------------------------
# Kernels
# ---------------------------------------------------------------------------
def ffn_kernel_acc_in_out(x_ref, w1_ref, b1_ref, w2_ref, b2_ref, o_ref):
    """f32 output tile doubles as the accumulator (resident across h axis)."""
    h = pl.program_id(1)

    # Fold b2 into the (resident) output exactly once, at the first h block.
    @pl.when(h == 0)
    def _():
        o_ref[...] = jnp.broadcast_to(b2_ref[...], o_ref.shape)

    # (tm, Cp) @ (Cp, th) -> (tm, th) on the MXU, f32 accumulate.
    hid = jnp.dot(x_ref[...], w1_ref[...], preferred_element_type=jnp.float32)
    hid = jnp.maximum(hid + b1_ref[...], 0.0)            # bias + ReLU, f32

    # (tm, th) @ (th, Cp) -> (tm, Cp), accumulated directly into the output.
    o_ref[...] += jnp.dot(hid.astype(w2_ref.dtype), w2_ref[...],
                          preferred_element_type=jnp.float32)
    # Dropout == identity (eval).


def ffn_kernel_scratch(x_ref, w1_ref, b1_ref, w2_ref, b2_ref, o_ref, acc_ref):
    """Generic path (narrow output dtype): f32 VMEM scratch accumulator."""
    h = pl.program_id(1)

    @pl.when(h == 0)
    def _():
        acc_ref[...] = jnp.broadcast_to(b2_ref[...], acc_ref.shape)

    hid = jnp.dot(x_ref[...], w1_ref[...], preferred_element_type=jnp.float32)
    hid = jnp.maximum(hid + b1_ref[...], 0.0)
    acc_ref[...] += jnp.dot(hid.astype(w2_ref.dtype), w2_ref[...],
                            preferred_element_type=jnp.float32)

    @pl.when(h == pl.num_programs(1) - 1)
    def _():
        o_ref[...] = acc_ref[...].astype(o_ref.dtype)


# ---------------------------------------------------------------------------
# Hardware-aware budgets
# ---------------------------------------------------------------------------
def _hw_budget():
    """Returns (vmem_limit_bytes, tile_budget_bytes, num_tensorcores)."""
    vmem = 128 * 1024 * 1024
    try:
        vmem = int(pltpu.get_tpu_info().vmem_capacity_bytes)
    except Exception:
        pass
    mib = 1024 * 1024
    if vmem <= 64 * mib:
        # v7x-like: 64 MiB per TensorCore, 2 TCs per chip.
        # Stay well under the physical limit (compiler-internal scratch).
        return 52 * mib, 44 * mib, 2
    # v5e / v6e: 128 MiB VMEM, single TensorCore. Push toward physical VMEM.
    return 112 * mib, 100 * mib, 1


# ---------------------------------------------------------------------------
# One-time parameter preparation (keeps weight cast/pad out of the hot path)
# ---------------------------------------------------------------------------
def prepare_ffn_params(w1, b1, w2, b2, *, compute_dtype=jnp.bfloat16,
                       th_target=512):
    """Pad + cast weights once. w1:(C,H) b1:(1,H)/(H,) w2:(H,C) b2:(1,C)/(C,)."""
    C, H = w1.shape
    Cp = _round_up(C, 128)
    # Hidden tile: aim for >= 256 (ideally 512) for the 256-wide MXUs, but do
    # not blow up tiny H; Hp is padded to a multiple of th so th always divides.
    th = max(128, min(_round_up(th_target, 128), _round_up(H, 128)))
    Hp = _round_up(H, th)

    w1p = jnp.zeros((Cp, Hp), compute_dtype).at[:C, :H].set(
        w1.astype(compute_dtype))
    w2p = jnp.zeros((Hp, Cp), compute_dtype).at[:H, :C].set(
        w2.astype(compute_dtype))
    b1p = jnp.zeros((1, Hp), jnp.float32).at[:, :H].set(
        jnp.reshape(b1, (1, H)).astype(jnp.float32))
    b2p = jnp.zeros((1, Cp), jnp.float32).at[:, :C].set(
        jnp.reshape(b2, (1, C)).astype(jnp.float32))

    return {"w1": w1p, "b1": b1p, "w2": w2p, "b2": b2p,
            "C": C, "H": H, "Cp": Cp, "Hp": Hp, "th": th,
            "compute_dtype": jnp.dtype(compute_dtype)}


# ---------------------------------------------------------------------------
# Forward pass
# ---------------------------------------------------------------------------
def feed_forward(x, params, *, tm=1024):
    """x: (..., C). params: output of prepare_ffn_params."""
    C, H = params["C"], params["H"]
    Cp, Hp = params["Cp"], params["Hp"]
    compute_dtype = params["compute_dtype"]
    cd_bytes = compute_dtype.itemsize

    *lead, Cx = x.shape
    assert Cx == C, f"expected last dim {C}, got {Cx}"
    M = 1
    for d in lead:
        M *= d

    vmem_limit, tile_budget, num_tc = _hw_budget()

    out_dtype = x.dtype
    out_is_f32 = (out_dtype == jnp.float32)
    out_itemsize = jnp.dtype(out_dtype).itemsize

    # ---- row tile (primary knob): big, but keep >= num_tc tiles for megacore
    tm_eff = min(tm, _round_up(M, 8))
    if num_tc >= 2 and M > 8:
        tm_eff = min(tm_eff, _round_up(pl.cdiv(M, num_tc), 8))
    tm_eff = max(8, _round_up(tm_eff, 8))
    th_eff = params["th"]

    def vmem_estimate(tm_, th_):
        b = 2 * tm_ * Cp * cd_bytes           # x tile (double-buffered)
        b += 2 * Cp * th_ * cd_bytes          # W1 slice
        b += 2 * th_ * Cp * cd_bytes          # W2 slice
        b += 2 * th_ * 4 + 2 * Cp * 4         # biases (f32)
        b += 2 * tm_ * Cp * out_itemsize      # output tile
        if not out_is_f32:
            b += tm_ * Cp * 4                 # f32 accumulator scratch
        return b

    # Shrink tm first (cheapest to give up), then th (only while it still
    # divides Hp and stays a multiple of 128).
    while vmem_estimate(tm_eff, th_eff) > tile_budget and tm_eff > 8:
        tm_eff = max(8, _round_up(tm_eff // 2, 8))
    while (vmem_estimate(tm_eff, th_eff) > tile_budget and th_eff > 128
           and (th_eff // 128) % 2 == 0):
        th_eff //= 2

    Mp = _round_up(M, tm_eff)
    grid = (Mp // tm_eff, Hp // th_eff)
    n_row_tiles = grid[0]

    # ---- per-call activation pad/cast only (weights already prepared) -------
    x2d = x.reshape(M, C)
    if (Mp, Cp) == (M, C) and x.dtype == compute_dtype:
        x_in = x2d
    else:
        x_in = jnp.zeros((Mp, Cp), compute_dtype).at[:M, :C].set(
            x2d.astype(compute_dtype))

    # Honest cost estimate: W1/W2 (and biases) are re-streamed per row tile.
    cost = pl.CostEstimate(
        flops=4 * M * C * H,
        transcendentals=0,
        bytes_accessed=(Mp * Cp * cd_bytes
                        + n_row_tiles * (Cp * Hp + Hp * Cp) * cd_bytes
                        + n_row_tiles * (Hp + Cp) * 4
                        + Mp * Cp * out_itemsize),
    )

    in_specs = [
        pl.BlockSpec((tm_eff, Cp), lambda i, h: (i, 0)),   # x row tile
        pl.BlockSpec((Cp, th_eff), lambda i, h: (0, h)),   # W1 slice
        pl.BlockSpec((1, th_eff),  lambda i, h: (0, h)),   # b1 slice
        pl.BlockSpec((th_eff, Cp), lambda i, h: (h, 0)),   # W2 slice
        pl.BlockSpec((1, Cp),      lambda i, h: (0, 0)),   # b2
    ]
    out_spec = pl.BlockSpec((tm_eff, Cp), lambda i, h: (i, 0))

    if out_is_f32:
        kernel = ffn_kernel_acc_in_out
        scratch = []
    else:
        kernel = ffn_kernel_scratch
        scratch = [pltpu.VMEM((tm_eff, Cp), jnp.float32)]

    out2d = pl.pallas_call(
        kernel,
        out_shape=jax.ShapeDtypeStruct((Mp, Cp), out_dtype),
        grid_spec=pltpu.PrefetchScalarGridSpec(
            num_scalar_prefetch=0,
            grid=grid,
            in_specs=in_specs,
            out_specs=out_spec,
            scratch_shapes=scratch,
        ),
        compiler_params=pltpu.CompilerParams(
            dimension_semantics=("parallel", "arbitrary"),
            vmem_limit_bytes=int(vmem_limit),
        ),
        cost_estimate=cost,
    )(x_in, params["w1"], params["b1"], params["w2"], params["b2"])

    return out2d[:M, :C].reshape(*lead, C)


# ---------------------------------------------------------------------------
# Param init mimicking nn.Linear's uniform(-1/sqrt(fan_in), +1/sqrt(fan_in))
# ---------------------------------------------------------------------------
def init_params(key, n_embd):
    hidden = 4 * n_embd
    k1, k2, k3, k4 = jax.random.split(key, 4)
    lim1 = 1.0 / jnp.sqrt(n_embd)
    lim2 = 1.0 / jnp.sqrt(hidden)
    # Stored already-transposed relative to PyTorch: (in, out)
    w1 = jax.random.uniform(k1, (n_embd, hidden), jnp.float32, -lim1, lim1)
    b1 = jax.random.uniform(k2, (1, hidden), jnp.float32, -lim1, lim1)
    w2 = jax.random.uniform(k3, (hidden, n_embd), jnp.float32, -lim2, lim2)
    b2 = jax.random.uniform(k4, (1, n_embd), jnp.float32, -lim2, lim2)
    return w1, b1, w2, b2


if __name__ == "__main__":
    key = jax.random.PRNGKey(0)
    B, T, n_embd = 2, 8, 32          # hidden = 4 * n_embd = 128
    kx, kp = jax.random.split(key)

    x = jax.random.normal(kx, (B, T, n_embd), jnp.float32)
    w1, b1, w2, b2 = init_params(kp, n_embd)

    # One-time weight preparation (pad + bf16 cast), then the kernel call.
    params = prepare_ffn_params(w1, b1, w2, b2)
    y = feed_forward(x, params)
    y = jax.block_until_ready(y)

    # Reference in plain JAX, using the same bf16 operand precision as the
    # kernel (the hidden activation is deliberately bf16 before the second
    # matmul, matching the kernel's MXU inputs).
    xb = x.reshape(-1, n_embd).astype(jnp.bfloat16).astype(jnp.float32)
    w1b = w1.astype(jnp.bfloat16).astype(jnp.float32)
    w2b = w2.astype(jnp.bfloat16).astype(jnp.float32)
    h = jnp.maximum(xb @ w1b + b1, 0.0)
    h = h.astype(jnp.bfloat16).astype(jnp.float32)
    ref = (h @ w2b + b2).reshape(B, T, n_embd)

    assert y.shape == (B, T, n_embd)
    assert jnp.allclose(y, ref, atol=2e-2, rtol=2e-2), (
        float(jnp.max(jnp.abs(y - ref))))

    print("KERNEL_OK")
</pallas_src>

<mosaic_0001>
module attributes {stable_mosaic.version = 11 : i64} {
  func.func @ffn_kernel_acc_in_out(%arg0: i32, %arg1: i32, %arg2: memref<16x128xbf16, #tpu.memory_space<vmem>>, %arg3: memref<128x128xbf16, #tpu.memory_space<vmem>>, %arg4: memref<1x128xf32, #tpu.memory_space<vmem>>, %arg5: memref<128x128xbf16, #tpu.memory_space<vmem>>, %arg6: memref<1x128xf32, #tpu.memory_space<vmem>>, %arg7: memref<16x128xf32, #tpu.memory_space<vmem>>) attributes {dimension_semantics = [#tpu.dimension_semantics<parallel>, #tpu.dimension_semantics<arbitrary>], iteration_bounds = array<i64: 1, 1>, scalar_prefetch = 0 : i64, scratch_operands = 0 : i64, tpu.core_type = #tpu.core_type<tc>, window_params = [{transform_indices = @transform_0, window_bounds = array<i64: 16, 128>}, {transform_indices = @transform_1, window_bounds = array<i64: 128, 128>}, {transform_indices = @transform_2, window_bounds = array<i64: 1, 128>}, {transform_indices = @transform_3, window_bounds = array<i64: 128, 128>}, {pipeline_mode = #tpu.pipeline_mode<synchronous>, transform_indices = @transform_4, window_bounds = array<i64: 1, 128>}, {transform_indices = @transform_5, window_bounds = array<i64: 16, 128>}]} {
    %c0_i32 = arith.constant 0 : i32
    %0 = arith.cmpi eq, %arg1, %c0_i32 : i32
    %1 = arith.extui %0 : i1 to i32
    %c0_i32_0 = arith.constant 0 : i32
    %2 = arith.cmpi ne, %1, %c0_i32_0 : i32
    scf.if %2 {
      %c0_14 = arith.constant 0 : index
      %c0_15 = arith.constant 0 : index
      %17 = vector.load %arg6[%c0_14, %c0_15] : memref<1x128xf32, #tpu.memory_space<vmem>>, vector<1x128xf32>
      %18 = vector.shape_cast %17 : vector<1x128xf32> to vector<1x128xf32>
      %19 = vector.broadcast %18 : vector<1x128xf32> to vector<16x128xf32>
      %c0_16 = arith.constant 0 : index
      %c0_17 = arith.constant 0 : index
      %20 = vector.load %arg7[%c0_16, %c0_17] : memref<16x128xf32, #tpu.memory_space<vmem>>, vector<16x128xf32>
      tpu.vector_store %arg7[%c0_16, %c0_17], %19 {strides = array<i32>} : memref<16x128xf32, #tpu.memory_space<vmem>>, vector<16x128xf32>,
    } else {
    }
    %c0 = arith.constant 0 : index
    %c0_1 = arith.constant 0 : index
    %3 = vector.load %arg2[%c0, %c0_1] : memref<16x128xbf16, #tpu.memory_space<vmem>>, vector<16x128xbf16>
    %c0_2 = arith.constant 0 : index
    %c0_3 = arith.constant 0 : index
    %4 = vector.load %arg3[%c0_2, %c0_3] : memref<128x128xbf16, #tpu.memory_space<vmem>>, vector<128x128xbf16>
    %cst = arith.constant dense<0.000000e+00> : vector<16x128xf32>
    %5 = tpu.matmul %3, %4, %cst {dimension_numbers = #tpu.dot_dimension_numbers<[1], [0], [0], [1], [0, 0, 1, 1], [], []>} : vector<16x128xbf16>, vector<128x128xbf16>, vector<16x128xf32> -> vector<16x128xf32>
    %c0_4 = arith.constant 0 : index
    %c0_5 = arith.constant 0 : index
    %6 = vector.load %arg4[%c0_4, %c0_5] : memref<1x128xf32, #tpu.memory_space<vmem>>, vector<1x128xf32>
    %7 = vector.broadcast %6 : vector<1x128xf32> to vector<16x128xf32>
    %8 = arith.addf %5, %7 : vector<16x128xf32>
    %cst_6 = arith.constant 0.000000e+00 : f32
    %9 = vector.broadcast %cst_6 : f32 to vector<16x128xf32>
    %10 = arith.maximumf %8, %9 : vector<16x128xf32>
    %c0_7 = arith.constant 0 : index
    %c0_8 = arith.constant 0 : index
    %11 = vector.load %arg7[%c0_7, %c0_8] : memref<16x128xf32, #tpu.memory_space<vmem>>, vector<16x128xf32>
    %12 = arith.truncf %10 : vector<16x128xf32> to vector<16x128xbf16>
    %c0_9 = arith.constant 0 : index
    %c0_10 = arith.constant 0 : index
    %13 = vector.load %arg5[%c0_9, %c0_10] : memref<128x128xbf16, #tpu.memory_space<vmem>>, vector<128x128xbf16>
    %cst_11 = arith.constant dense<0.000000e+00> : vector<16x128xf32>
    %14 = tpu.matmul %12, %13, %cst_11 {dimension_numbers = #tpu.dot_dimension_numbers<[1], [0], [0], [1], [0, 0, 1, 1], [], []>} : vector<16x128xbf16>, vector<128x128xbf16>, vector<16x128xf32> -> vector<16x128xf32>
    %15 = arith.addf %11, %14 : vector<16x128xf32>
    %c0_12 = arith.constant 0 : index
    %c0_13 = arith.constant 0 : index
    %16 = vector.load %arg7[%c0_12, %c0_13] : memref<16x128xf32, #tpu.memory_space<vmem>>, vector<16x128xf32>
    tpu.vector_store %arg7[%c0_12, %c0_13], %15 {strides = array<i32>} : memref<16x128xf32, #tpu.memory_space<vmem>>, vector<16x128xf32>,
    return
  }
  func.func @transform_0(%arg0: i32, %arg1: i32) -> (i32, i32) {
    %c0_i32 = arith.constant 0 : i32
    %c0_i32_0 = arith.constant 0 : i32
    return %arg0, %c0_i32 : i32, i32
  }
  func.func @transform_1(%arg0: i32, %arg1: i32) -> (i32, i32) {
    %c0_i32 = arith.constant 0 : i32
    %c0_i32_0 = arith.constant 0 : i32
    return %c0_i32, %arg1 : i32, i32
  }
  func.func @transform_2(%arg0: i32, %arg1: i32) -> (i32, i32) {
    %c0_i32 = arith.constant 0 : i32
    %c0_i32_0 = arith.constant 0 : i32
    return %c0_i32, %arg1 : i32, i32
  }
  func.func @transform_3(%arg0: i32, %arg1: i32) -> (i32, i32) {
    %c0_i32 = arith.constant 0 : i32
    %c0_i32_0 = arith.constant 0 : i32
    return %arg1, %c0_i32 : i32, i32
  }
  func.func @transform_4(%arg0: i32, %arg1: i32) -> (i32, i32) {
    %c0_i32 = arith.constant 0 : i32
    %c0_i32_0 = arith.constant 0 : i32
    %c0_i32_1 = arith.constant 0 : i32
    return %c0_i32, %c0_i32_0 : i32, i32
  }
  func.func @transform_5(%arg0: i32, %arg1: i32) -> (i32, i32) {
    %c0_i32 = arith.constant 0 : i32
    %c0_i32_0 = arith.constant 0 : i32
    return %arg0, %c0_i32 : i32, i32
  }
}

</mosaic_0001>

<llo_original>
// kernel: tpu_custom_call.1
$region0: #{tpu_custom_call.1}
  #allocation0 [shape = 'u32[]', space=smem, size = 0x4, offset = 0x4, fixed_abs, tag = 'smem constant byte address 0x4 - core index']
  #allocation1 [shape = 'u32[144,128]{1,0:T(1,128)}', space=vmem, size = 0x12000, scoped, tag = 'internal scratch']
  %s0 = inlined_call_operand.hbm [shape: bf16[16,128], index: 0, kind: input, shape index: {}]
  %s1 = inlined_call_operand.hbm [shape: bf16[128,128], index: 1, kind: input, shape index: {}]
  %s2 = inlined_call_operand.hbm [shape: f32[1,128], index: 2, kind: input, shape index: {}]
  %s3 = inlined_call_operand.hbm [shape: bf16[128,128], index: 3, kind: input, shape index: {}]
  %s4 = inlined_call_operand.hbm [shape: f32[1,128], index: 4, kind: input, shape index: {}]
  %s5 = inlined_call_operand.hbm [shape: f32[16,128], index: 5, kind: output, shape index: {}]
  %s6 = sld [smem:[#allocation0]]
  $region54: #{tpu_custom_call.1} parent=0
    _
  %s8 = ssub.s32 1, %s6
  %s9 = scalar_select 0, %s8, %s6
  $region1: #{tpu_custom_call.1} parent=0
    #allocation2 [shape = 'u8[4096]{0}', space=vmem, size = 0x1000, scoped, tag = 'input window, operand 0, single buffered']
    #allocation3 [shape = 's32[1]{0}', space=sflag, size = 0x4, scoped, tag = 'scoped memory for tpu_custom_call.1']
    #allocation4 [shape = 's32[1]{0}', space=sflag, size = 0x4, scoped, tag = 'scoped memory for tpu_custom_call.1']
    #allocation5 [shape = 'u8[32768]{0}', space=vmem, size = 0x8000, scoped, tag = 'input window, operand 1, single buffered']
    #allocation6 [shape = 's32[1]{0}', space=sflag, size = 0x4, scoped, tag = 'scoped memory for tpu_custom_call.1']
    #allocation7 [shape = 'u8[512]{0}', space=vmem, size = 0x400, scoped, tag = 'input window, operand 2, single buffered']
    #allocation8 [shape = 'u8[32768]{0}', space=vmem, size = 0x8000, scoped, tag = 'input window, operand 3, single buffered']
    #allocation9 [shape = 's32[1]{0}', space=sflag, size = 0x4, scoped, tag = 'scoped memory for tpu_custom_call.1']
    #allocation10 [shape = 'u8[512]{0}', space=vmem, size = 0x400, scoped, tag = 'input window, operand 4, single buffered']
    #allocation11 [shape = 'u8[8192]{0}', space=vmem, size = 0x2000, scoped, tag = 'output window, operand 0, single buffered']
    %10 = vsyncpa [#allocation3], 0
    %11 = vsyncpa [#allocation6], 0
    %12 = vsyncpa [#allocation9], 0
    %13 = vsyncpa [#allocation4], 0
    // Predicated region
    $region2: #{tpu_custom_call.1} parent=1 // pred_check
      _
    $region3: #{tpu_custom_call.1} parent=1 // pred_check_branch
      %15 = sbr.rel (0) target = $region5
    $region4: #{tpu_custom_call.1} parent=1 // pred_region
      %s17 = ssub.s32 128, 128
      %18 = vsyncadd [#allocation3], %s17
      %s19 = sshll.u32 [#allocation2], 4
      %s20 = int_to_ptr.vmem [resolvable:$true] %s19
      %25 = dma.hbm_to_vmem [thread:$0]  %s0, 128, %s20, [#allocation3], 64, 64, 4
    $region5: #{tpu_custom_call.1} parent=1 // pred_fallthru
      _
    // Predicated region
    $region6: #{tpu_custom_call.1} parent=1 // pred_check
      _
    $region7: #{tpu_custom_call.1} parent=1 // pred_check_branch
      %27 = sbr.rel (0) target = $region9
    $region8: #{tpu_custom_call.1} parent=1 // pred_region
      %s29 = ssub.s32 1024, 1024
      %30 = vsyncadd [#allocation6], %s29
      %s31 = sshll.u32 [#allocation5], 4
      %s32 = int_to_ptr.vmem [resolvable:$true] %s31
      %37 = dma.hbm_to_vmem [thread:$0]  %s1, 1024, %s32, [#allocation6], 64, 64, 4
    $region9: #{tpu_custom_call.1} parent=1 // pred_fallthru
      _
    // Predicated region
    $region10: #{tpu_custom_call.1} parent=1 // pred_check
      _
    $region11: #{tpu_custom_call.1} parent=1 // pred_check_branch
      %39 = sbr.rel (0) target = $region13
    $region12: #{tpu_custom_call.1} parent=1 // pred_region
      %s41 = ssub.s32 16, 16
      %42 = vsyncadd [#allocation6], %s41
      %s44 = sshll.u32 [#allocation7], 4
      %s45 = int_to_ptr.vmem [resolvable:$true] %s44
      %47 = dma.hbm_to_vmem [thread:$0]  %s2, 16, %s45, [#allocation6]
    $region13: #{tpu_custom_call.1} parent=1 // pred_fallthru
      _
    // Predicated region
    $region14: #{tpu_custom_call.1} parent=1 // pred_check
      _
    $region15: #{tpu_custom_call.1} parent=1 // pred_check_branch
      %49 = sbr.rel (0) target = $region17
    $region16: #{tpu_custom_call.1} parent=1 // pred_region
      %s51 = ssub.s32 1024, 1024
      %52 = vsyncadd [#allocation9], %s51
      %s53 = sshll.u32 [#allocation8], 4
      %s54 = int_to_ptr.vmem [resolvable:$true] %s53
      %59 = dma.hbm_to_vmem [thread:$0]  %s3, 1024, %s54, [#allocation9], 64, 64, 4
    $region17: #{tpu_custom_call.1} parent=1 // pred_fallthru
      _
    // Predicated region
    $region18: #{tpu_custom_call.1} parent=1 // pred_check
      _
    $region19: #{tpu_custom_call.1} parent=1 // pred_check_branch
      %61 = sbr.rel (0) target = $region21
    $region20: #{tpu_custom_call.1} parent=1 // pred_region
      %s63 = ssub.s32 16, 16
      %64 = vsyncadd [#allocation9], %s63
      %s66 = sshll.u32 [#allocation10], 4
      %s67 = int_to_ptr.vmem [resolvable:$true] %s66
      %69 = dma.hbm_to_vmem [thread:$0]  %s4, 16, %s67, [#allocation9]
    $region21: #{tpu_custom_call.1} parent=1 // pred_fallthru
      _
    // Predicated region
    $region22: #{tpu_custom_call.1} parent=1 // pred_check
      _
    $region23: #{tpu_custom_call.1} parent=1 // pred_check_branch
      %71 = sbr.rel (0) target = $region25
    $region24: #{tpu_custom_call.1} parent=1 // pred_region
      %72 = dma.done [#allocation3], 128
    $region25: #{tpu_custom_call.1} parent=1 // pred_fallthru
      _
    // Predicated region
    $region26: #{tpu_custom_call.1} parent=1 // pred_check
      _
    $region27: #{tpu_custom_call.1} parent=1 // pred_check_branch
      %74 = sbr.rel (0) target = $region29
    $region28: #{tpu_custom_call.1} parent=1 // pred_region
      %75 = dma.done [#allocation6], 1024
    $region29: #{tpu_custom_call.1} parent=1 // pred_fallthru
      _
    // Predicated region
    $region30: #{tpu_custom_call.1} parent=1 // pred_check
      _
    $region31: #{tpu_custom_call.1} parent=1 // pred_check_branch
      %77 = sbr.rel (0) target = $region33
    $region32: #{tpu_custom_call.1} parent=1 // pred_region
      %78 = dma.done [#allocation6], 16
    $region33: #{tpu_custom_call.1} parent=1 // pred_fallthru
      _
    // Predicated region
    $region34: #{tpu_custom_call.1} parent=1 // pred_check
      _
    $region35: #{tpu_custom_call.1} parent=1 // pred_check_branch
      %80 = sbr.rel (0) target = $region37
    $region36: #{tpu_custom_call.1} parent=1 // pred_region
      %81 = dma.done [#allocation9], 1024
    $region37: #{tpu_custom_call.1} parent=1 // pred_fallthru
      _
    // Predicated region
    $region38: #{tpu_custom_call.1} parent=1 // pred_check
      _
    $region39: #{tpu_custom_call.1} parent=1 // pred_check_branch
      %83 = sbr.rel (0) target = $region41
    $region40: #{tpu_custom_call.1} parent=1 // pred_region
      %84 = dma.done [#allocation9], 16
    $region41: #{tpu_custom_call.1} parent=1 // pred_fallthru
      _
    %p86 = scmp.eq.s32.totalorder 0, 0
    // Predicated region
    $region42: #{tpu_custom_call.1} parent=1 // pred_check
      %p87 = pneg %p86
    $region43: #{tpu_custom_call.1} parent=1 // pred_check_branch
      %89 = sbr.rel (%p87) target = $region45
    $region44: #{tpu_custom_call.1} parent=1 // pred_region
      %v90 = vld [vmem:[#allocation10] sm:$0x1]
      %v92 = vlaneseq
      %v93 = vshrl.u32 %v92, 7
      %v94 = vsub.s32 0, %v93
      %v95 = vrot.slane %v90, %v94
      %97 = vst [vmem:[#allocation11] sm:$0xff] %v95
      %98 = vst [vmem:[#allocation11 + $0x8] sm:$0xff] %v95
    $region45: #{tpu_custom_call.1} parent=1 // pred_fallthru
      _
    %v99 = vld [vmem:[#allocation2] sm:$0xf]
    %v100 = vld [vmem:[#allocation2 + $0x4] sm:$0xf]
    %v101 = vld [vmem:[#allocation5] sm:$0xf]
    %v102 = vld [vmem:[#allocation5 + $0x4] sm:$0xf]
    %v103 = vld [vmem:[#allocation5 + $0x8] sm:$0xf]
    %v104 = vld [vmem:[#allocation5 + $0xc] sm:$0xf]
    %v105 = vld [vmem:[#allocation5 + $0x10] sm:$0xf]
    %v106 = vld [vmem:[#allocation5 + $0x14] sm:$0xf]
    %v107 = vld [vmem:[#allocation5 + $0x18] sm:$0xf]
    %v108 = vld [vmem:[#allocation5 + $0x1c] sm:$0xf]
    %v109 = vld [vmem:[#allocation5 + $0x20] sm:$0xf]
    %v110 = vld [vmem:[#allocation5 + $0x24] sm:$0xf]
    %v111 = vld [vmem:[#allocation5 + $0x28] sm:$0xf]
    %v112 = vld [vmem:[#allocation5 + $0x2c] sm:$0xf]
    %v113 = vld [vmem:[#allocation5 + $0x30] sm:$0xf]
    %v114 = vld [vmem:[#allocation5 + $0x34] sm:$0xf]
    %v115 = vld [vmem:[#allocation5 + $0x38] sm:$0xf]
    %v116 = vld [vmem:[#allocation5 + $0x3c] sm:$0xf]
    %v117 = vld [vmem:[#allocation7] sm:$0x1]
    %v119 = vlaneseq
    %v120 = vshrl.u32 %v119, 7
    %v121 = vsub.s32 0, %v120
    %v122 = vrot.slane %v117, %v121
    %v126 = vunpack.c.l.b16 %v99
    %v127 = vunpack.c.l.b16 %v100
    %v128 = vpack.c.b16 %v127, %v126
    %v146 = vunpack.c.l.b16 %v101
    %v147 = vunpack.c.l.b16 %v102
    %v148 = vunpack.c.l.b16 %v103
    %v149 = vunpack.c.l.b16 %v104
    %v150 = vunpack.c.l.b16 %v105
    %v151 = vunpack.c.l.b16 %v106
    %v152 = vunpack.c.l.b16 %v107
    %v153 = vunpack.c.l.b16 %v108
    %v154 = vunpack.c.l.b16 %v109
    %v155 = vunpack.c.l.b16 %v110
    %v156 = vunpack.c.l.b16 %v111
    %v157 = vunpack.c.l.b16 %v112
    %v158 = vunpack.c.l.b16 %v113
    %v159 = vunpack.c.l.b16 %v114
    %v160 = vunpack.c.l.b16 %v115
    %v161 = vunpack.c.l.b16 %v116
    %v162 = vpack.c.b16 %v147, %v146
    %v163 = vpack.c.b16 %v149, %v148
    %v164 = vpack.c.b16 %v151, %v150
    %v165 = vpack.c.b16 %v153, %v152
    %v166 = vpack.c.b16 %v155, %v154
    %v167 = vpack.c.b16 %v157, %v156
    %v168 = vpack.c.b16 %v159, %v158
    %v169 = vpack.c.b16 %v161, %v160
    %178 = vmatprep.subr.bf16.mxu0 0
    %179 = vmatpush1.bf16.msra.mxu0 %v162
    %180 = vmatprep.subr.bf16.mxu0 0
    %181 = vmatpush1.bf16.msra.mxu0 %v163
    %182 = vmatprep.subr.bf16.mxu0 0
    %183 = vmatpush1.bf16.msra.mxu0 %v164
    %184 = vmatprep.subr.bf16.mxu0 0
    %185 = vmatpush1.bf16.msra.mxu0 %v165
    %186 = vmatprep.subr.bf16.mxu0 0
    %187 = vmatpush1.bf16.msra.mxu0 %v166
    %188 = vmatprep.subr.bf16.mxu0 0
    %189 = vmatpush1.bf16.msra.mxu0 %v167
    %190 = vmatprep.subr.bf16.mxu0 0
    %191 = vmatpush1.bf16.msra.mxu0 %v168
    %192 = vmatprep.subr.bf16.mxu0 0
    %193 = vmatpush1.bf16.msra.mxu0 %v169
    %194 = vmatprep.subr.bf16.mxu0 0
    %195 = vmatpush1.bf16.msra.mxu0 0
    %196 = vmatprep.subr.bf16.mxu0 0
    %197 = vmatpush1.bf16.msra.mxu0 0
    %198 = vmatprep.subr.bf16.mxu0 0
    %199 = vmatpush1.bf16.msra.mxu0 0
    %200 = vmatprep.subr.bf16.mxu0 0
    %201 = vmatpush1.bf16.msra.mxu0 0
    %202 = vmatprep.subr.bf16.mxu0 0
    %203 = vmatpush1.bf16.msra.mxu0 0
    %204 = vmatprep.subr.bf16.mxu0 0
    %205 = vmatpush1.bf16.msra.mxu0 0
    %206 = vmatprep.subr.bf16.mxu0 0
    %207 = vmatpush1.bf16.msra.mxu0 0
    %208 = vmatprep.subr.bf16.mxu0 0
    %209 = vmatpush1.bf16.msra.mxu0 0
    %210 = vmatprep.mubr.bf16.mxu0 0
    %211 = vmatmul.mubr.bf16.gmra.mrb[0].mxu0 %v128
    %v212 = vpop.f32.mrb[0].mxu0
    %v213 = vadd.f32 %v122, %v212
    %v214 = vpop.f32.mrb[0].mxu0
    %v215 = vpop.f32.mrb[0].mxu0
    %v216 = vadd.f32 %v122, %v215
    %v217 = vpop.f32.mrb[0].mxu0
    %218 = vdwg.mxu0
    %v219 = vmax.f32 %v213, 0.0
    %v220 = vmax.f32 %v216, 0.0
    %v221 = vld [vmem:[#allocation11] sm:$0xff]
    %v222 = vld [vmem:[#allocation11 + $0x8] sm:$0xff]
    %v223 = vpack.c.bf16 %v220, %v219
    %v224 = vld [vmem:[#allocation8] sm:$0xf]
    %v225 = vld [vmem:[#allocation8 + $0x4] sm:$0xf]
    %v226 = vld [vmem:[#allocation8 + $0x8] sm:$0xf]
    %v227 = vld [vmem:[#allocation8 + $0xc] sm:$0xf]
    %v228 = vld [vmem:[#allocation8 + $0x10] sm:$0xf]
    %v229 = vld [vmem:[#allocation8 + $0x14] sm:$0xf]
    %v230 = vld [vmem:[#allocation8 + $0x18] sm:$0xf]
    %v231 = vld [vmem:[#allocation8 + $0x1c] sm:$0xf]
    %v232 = vld [vmem:[#allocation8 + $0x20] sm:$0xf]
    %v233 = vld [vmem:[#allocation8 + $0x24] sm:$0xf]
    %v234 = vld [vmem:[#allocation8 + $0x28] sm:$0xf]
    %v235 = vld [vmem:[#allocation8 + $0x2c] sm:$0xf]
    %v236 = vld [vmem:[#allocation8 + $0x30] sm:$0xf]
    %v237 = vld [vmem:[#allocation8 + $0x34] sm:$0xf]
    %v238 = vld [vmem:[#allocation8 + $0x38] sm:$0xf]
    %v239 = vld [vmem:[#allocation8 + $0x3c] sm:$0xf]
    %v256 = vunpack.c.l.b16 %v224
    %v257 = vunpack.c.l.b16 %v225
    %v258 = vunpack.c.l.b16 %v226
    %v259 = vunpack.c.l.b16 %v227
    %v260 = vunpack.c.l.b16 %v228
    %v261 = vunpack.c.l.b16 %v229
    %v262 = vunpack.c.l.b16 %v230
    %v263 = vunpack.c.l.b16 %v231
    %v264 = vunpack.c.l.b16 %v232
    %v265 = vunpack.c.l.b16 %v233
    %v266 = vunpack.c.l.b16 %v234
    %v267 = vunpack.c.l.b16 %v235
    %v268 = vunpack.c.l.b16 %v236
    %v269 = vunpack.c.l.b16 %v237
    %v270 = vunpack.c.l.b16 %v238
    %v271 = vunpack.c.l.b16 %v239
    %v272 = vpack.c.b16 %v257, %v256
    %v273 = vpack.c.b16 %v259, %v258
    %v274 = vpack.c.b16 %v261, %v260
    %v275 = vpack.c.b16 %v263, %v262
    %v276 = vpack.c.b16 %v265, %v264
    %v277 = vpack.c.b16 %v267, %v266
    %v278 = vpack.c.b16 %v269, %v268
    %v279 = vpack.c.b16 %v271, %v270
    %288 = vmatprep.subr.bf16.mxu0 0
    %289 = vmatpush1.bf16.msra.mxu0 %v272
    %290 = vmatprep.subr.bf16.mxu0 0
    %291 = vmatpush1.bf16.msra.mxu0 %v273
    %292 = vmatprep.subr.bf16.mxu0 0
    %293 = vmatpush1.bf16.msra.mxu0 %v274
    %294 = vmatprep.subr.bf16.mxu0 0
    %295 = vmatpush1.bf16.msra.mxu0 %v275
    %296 = vmatprep.subr.bf16.mxu0 0
    %297 = vmatpush1.bf16.msra.mxu0 %v276
    %298 = vmatprep.subr.bf16.mxu0 0
    %299 = vmatpush1.bf16.msra.mxu0 %v277
    %300 = vmatprep.subr.bf16.mxu0 0
    %301 = vmatpush1.bf16.msra.mxu0 %v278
    %302 = vmatprep.subr.bf16.mxu0 0
    %303 = vmatpush1.bf16.msra.mxu0 %v279
    %304 = vmatprep.subr.bf16.mxu0 0
    %305 = vmatpush1.bf16.msra.mxu0 0
    %306 = vmatprep.subr.bf16.mxu0 0
    %307 = vmatpush1.bf16.msra.mxu0 0
    %308 = vmatprep.subr.bf16.mxu0 0
    %309 = vmatpush1.bf16.msra.mxu0 0
    %310 = vmatprep.subr.bf16.mxu0 0
    %311 = vmatpush1.bf16.msra.mxu0 0
    %312 = vmatprep.subr.bf16.mxu0 0
    %313 = vmatpush1.bf16.msra.mxu0 0
    %314 = vmatprep.subr.bf16.mxu0 0
    %315 = vmatpush1.bf16.msra.mxu0 0
    %316 = vmatprep.subr.bf16.mxu0 0
    %317 = vmatpush1.bf16.msra.mxu0 0
    %318 = vmatprep.subr.bf16.mxu0 0
    %319 = vmatpush1.bf16.msra.mxu0 0
    %320 = vmatprep.mubr.bf16.mxu0 0
    %321 = vmatmul.mubr.bf16.gmra.mrb[0].mxu0 %v223
    %v322 = vpop.f32.mrb[0].mxu0
    %v323 = vadd.f32 0.0, %v322
    %v324 = vpop.f32.mrb[0].mxu0
    %v325 = vpop.f32.mrb[0].mxu0
    %v326 = vadd.f32 0.0, %v325
    %v327 = vpop.f32.mrb[0].mxu0
    %328 = vdwg.mxu0
    %v329 = vadd.f32 %v221, %v323
    %v330 = vadd.f32 %v222, %v326
    %331 = vst [vmem:[#allocation11] sm:$0xff] %v329
    %332 = vst [vmem:[#allocation11 + $0x8] sm:$0xff] %v330
    // Predicated region
    $region46: #{tpu_custom_call.1} parent=1 // pred_check
      _
    $region47: #{tpu_custom_call.1} parent=1 // pred_check_branch
      %334 = sbr.rel (0) target = $region49
    $region48: #{tpu_custom_call.1} parent=1 // pred_region
      %s336 = ssub.s32 256, 256
      %337 = vsyncadd [#allocation4], %s336
      %s338 = sshll.u32 [#allocation11], 4
      %s339 = int_to_ptr.vmem [resolvable:$true] %s338
      %344 = dma.vmem_to_hbm [thread:$0]  %s339, 256, %s5, [#allocation4], 128, 128, 8
    $region49: #{tpu_custom_call.1} parent=1 // pred_fallthru
      _
    // Predicated region
    $region50: #{tpu_custom_call.1} parent=1 // pred_check
      _
    $region51: #{tpu_custom_call.1} parent=1 // pred_check_branch
      %346 = sbr.rel (0) target = $region53
    $region52: #{tpu_custom_call.1} parent=1 // pred_region
      %347 = dma.done [#allocation4], 256
    $region53: #{tpu_custom_call.1} parent=1 // pred_fallthru
      _
    %348 = vsyncpa [#allocation3], 1
    %349 = vsyncpa [#allocation6], 1
    %350 = vsyncpa [#allocation9], 1
    %351 = vsyncpa [#allocation4], 1

</llo_original>
